<compile_context>
chip_gen: v5e
topology: v5e:2x2
jax: 0.10.0
libtpu: 0.0.40
codegen_flags: <defaults>
</compile_context>

<pallas_src>
import functools

import jax
import jax.numpy as jnp
from jax.experimental import pallas as pl
from jax.experimental.pallas import tpu as pltpu


def _shift_kernel(shift_ref, x_ref, out_ref, *, pad, block_b, c, h, w):
    # shift_ref : SMEM (2*n,) int32, scalar-prefetched; [2b] = sx (width), [2b+1] = sy (height).
    # x_ref     : VMEM (block_b, c, h, w) input block (auto-pipelined).
    # out_ref   : VMEM (block_b, c, h, w) output block (auto-pipelined).
    g = pl.program_id(0)

    # Shift-independent iotas, hoisted out of the batch/channel loops.
    out_row = jax.lax.broadcasted_iota(jnp.int32, (h, h), 0)  # output row index i
    in_row = jax.lax.broadcasted_iota(jnp.int32, (h, h), 1)   # input  row index k
    in_col = jax.lax.broadcasted_iota(jnp.int32, (w, w), 0)   # input  col index k
    out_col = jax.lax.broadcasted_iota(jnp.int32, (w, w), 1)  # output col index j

    for i in range(block_b):  # static unroll over the batch sub-block
        b = g * block_b + i
        dx = shift_ref[2 * b] - pad       # width  shift in [-pad, pad]
        dy = shift_ref[2 * b + 1] - pad   # height shift in [-pad, pad]

        # Exact one-hot gather matrices (entries exactly 0.0 / 1.0):
        #   row_sel[i, k] = 1  iff  k == clamp(i + dy, 0, h-1)
        #   col_sel[k, j] = 1  iff  k == clamp(j + dx, 0, w-1)
        # so (row_sel @ X @ col_sel)[i, j] = X[clamp(i+dy), clamp(j+dx)], i.e. the
        # replicate-padded crop.  The clamp realizes the edge replication in-register.
        row_sel = (in_row == jnp.clip(out_row + dy, 0, h - 1)).astype(jnp.float32)
        col_sel = (in_col == jnp.clip(out_col + dx, 0, w - 1)).astype(jnp.float32)

        for ch in range(c):  # c is small (frame stack); static unroll
            xc = x_ref[i, ch].astype(jnp.float32)                           # (h, w)
            yc = jnp.dot(row_sel, xc, preferred_element_type=jnp.float32)   # gather rows
            zc = jnp.dot(yc, col_sel, preferred_element_type=jnp.float32)   # gather cols
            out_ref[i, ch] = zc.astype(out_ref.dtype)


def random_shifts_aug(x, shifts, pad, block_b=None):
    """Forward pass of RandomShiftsAug.

    x:      (n, c, h, w) float array, h == w
    shifts: (n, 2) integer array in [0, 2*pad]; shifts[:, 0] = x-shift (width),
            shifts[:, 1] = y-shift (height)  (matches the torch grid channel order).
    """
    n, c, h, w = x.shape
    assert h == w
    if pad == 0:
        return x

    # Defensive clamp + flatten to 1-D int32 (tiny SMEM footprint for scalar prefetch).
    shifts_flat = jnp.clip(shifts.astype(jnp.int32), 0, 2 * pad).reshape(-1)

    # Largest batch sub-block (divisor of n) whose input tile fits a small VMEM budget;
    # in/out tiles are each double-buffered by the auto-pipeline.
    if block_b is None:
        per_item = c * h * w * x.dtype.itemsize
        budget = 2 * 1024 * 1024
        block_b = 1
        for d in (16, 8, 4, 2, 1):
            if n % d == 0 and d * per_item <= budget:
                block_b = d
                break
    assert n % block_b == 0

    grid_spec = pltpu.PrefetchScalarGridSpec(
        num_scalar_prefetch=1,
        grid=(n // block_b,),
        in_specs=[pl.BlockSpec((block_b, c, h, w), lambda g, s: (g, 0, 0, 0))],
        out_specs=pl.BlockSpec((block_b, c, h, w), lambda g, s: (g, 0, 0, 0)),
    )
    kernel = functools.partial(
        _shift_kernel, pad=pad, block_b=block_b, c=c, h=h, w=w
    )
    return pl.pallas_call(
        kernel,
        grid_spec=grid_spec,
        out_shape=jax.ShapeDtypeStruct((n, c, h, w), x.dtype),
        compiler_params=pltpu.CompilerParams(
            dimension_semantics=("parallel",),  # independent batch blocks; v7x megacore
        ),
    )(shifts_flat, x)


def _reference(x, shifts, pad):
    # Pure-JAX reference: integer crop of the replicate-padded image (the exact
    # reduction of F.grid_sample documented above).
    n, c, h, w = x.shape
    xpad = jnp.pad(x, ((0, 0), (0, 0), (pad, pad), (pad, pad)), mode="edge")
    outs = []
    for b in range(n):
        sx = int(shifts[b, 0])
        sy = int(shifts[b, 1])
        outs.append(xpad[b, :, sy:sy + h, sx:sx + w])
    return jnp.stack(outs, axis=0)


if __name__ == "__main__":
    pad = 4
    n, c, h, w = 2, 4, 16, 16  # small shapes consistent with the module's forward

    key = jax.random.PRNGKey(0)
    kx, ks = jax.random.split(key)
    x = jax.random.normal(kx, (n, c, h, w), dtype=jnp.float32)
    # torch.randint(0, 2*pad+1, (n,1,1,2)) equivalent (RNG stream differs from torch).
    shifts = jax.random.randint(ks, (n, 2), 0, 2 * pad + 1, dtype=jnp.int32)

    out = random_shifts_aug(x, shifts, pad)
    out = jax.block_until_ready(out)

    ref = _reference(x, shifts, pad)
    assert out.shape == (n, c, h, w)
    assert out.dtype == x.dtype
    # One-hot gather is exact; tolerance only covers MXU multi-pass f32 emulation.
    assert jnp.allclose(out, ref, rtol=1e-4, atol=1e-6), "Pallas output does not match reference crop"
    print("KERNEL_OK")
</pallas_src>

<mosaic_0001>
module attributes {stable_mosaic.version = 11 : i64} {
  func.func @_shift_kernel(%arg0: i32, %arg1: memref<4xi32, #tpu.memory_space<smem>>, %arg2: memref<2x4x16x16xf32, #tpu.memory_space<vmem>>, %arg3: memref<2x4x16x16xf32, #tpu.memory_space<vmem>>) attributes {dimension_semantics = [#tpu.dimension_semantics<parallel>], iteration_bounds = array<i64: 1>, scalar_prefetch = 1 : i64, scratch_operands = 0 : i64, tpu.core_type = #tpu.core_type<tc>, window_params = [{transform_indices = @transform_0, window_bounds = array<i64: 2, 4, 16, 16>}, {transform_indices = @transform_1, window_bounds = array<i64: 2, 4, 16, 16>}]} {
    %0 = tpu.iota {dimensions = array<i32: 0>} : vector<16x16xi32>
    %1 = tpu.iota {dimensions = array<i32: 1>} : vector<16x16xi32>
    %2 = tpu.iota {dimensions = array<i32: 0>} : vector<16x16xi32>
    %3 = tpu.iota {dimensions = array<i32: 1>} : vector<16x16xi32>
    %c2_i32 = arith.constant 2 : i32
    %4 = arith.muli %arg0, %c2_i32 : i32
    %c0_i32 = arith.constant 0 : i32
    %5 = arith.addi %4, %c0_i32 : i32
    %c2_i32_0 = arith.constant 2 : i32
    %6 = arith.muli %c2_i32_0, %5 : i32
    %7 = arith.index_cast %6 : i32 to index
    %8 = memref.load %arg1[%7] : memref<4xi32, #tpu.memory_space<smem>>
    %c4_i32 = arith.constant 4 : i32
    %9 = arith.subi %8, %c4_i32 : i32
    %c2_i32_1 = arith.constant 2 : i32
    %10 = arith.muli %c2_i32_1, %5 : i32
    %c1_i32 = arith.constant 1 : i32
    %11 = arith.addi %10, %c1_i32 : i32
    %12 = arith.index_cast %11 : i32 to index
    %13 = memref.load %arg1[%12] : memref<4xi32, #tpu.memory_space<smem>>
    %c4_i32_2 = arith.constant 4 : i32
    %14 = arith.subi %13, %c4_i32_2 : i32
    %15 = vector.broadcast %14 : i32 to vector<16x16xi32>
    %16 = arith.addi %0, %15 : vector<16x16xi32>
    %c0_i32_3 = arith.constant 0 : i32
    %c15_i32 = arith.constant 15 : i32
    %17 = vector.broadcast %c0_i32_3 : i32 to vector<16x16xi32>
    %18 = arith.maxsi %17, %16 : vector<16x16xi32>
    %19 = vector.broadcast %c15_i32 : i32 to vector<16x16xi32>
    %20 = arith.minsi %19, %18 : vector<16x16xi32>
    %21 = arith.cmpi eq, %1, %20 : vector<16x16xi32>
    %22 = arith.extui %21 : vector<16x16xi1> to vector<16x16xi32>
    %23 = arith.sitofp %22 : vector<16x16xi32> to vector<16x16xf32>
    %24 = vector.broadcast %9 : i32 to vector<16x16xi32>
    %25 = arith.addi %3, %24 : vector<16x16xi32>
    %c0_i32_4 = arith.constant 0 : i32
    %c15_i32_5 = arith.constant 15 : i32
    %26 = vector.broadcast %c0_i32_4 : i32 to vector<16x16xi32>
    %27 = arith.maxsi %26, %25 : vector<16x16xi32>
    %28 = vector.broadcast %c15_i32_5 : i32 to vector<16x16xi32>
    %29 = arith.minsi %28, %27 : vector<16x16xi32>
    %30 = arith.cmpi eq, %2, %29 : vector<16x16xi32>
    %31 = arith.extui %30 : vector<16x16xi1> to vector<16x16xi32>
    %32 = arith.sitofp %31 : vector<16x16xi32> to vector<16x16xf32>
    %c0 = arith.constant 0 : index
    %c0_6 = arith.constant 0 : index
    %c0_7 = arith.constant 0 : index
    %c0_8 = arith.constant 0 : index
    %33 = vector.load %arg2[%c0, %c0_6, %c0_7, %c0_8] : memref<2x4x16x16xf32, #tpu.memory_space<vmem>>, vector<1x1x16x16xf32>
    %34 = vector.shape_cast %33 : vector<1x1x16x16xf32> to vector<16x16xf32>
    %cst = arith.constant dense<0.000000e+00> : vector<16x16xf32>
    %35 = tpu.matmul %23, %34, %cst {dimension_numbers = #tpu.dot_dimension_numbers<[1], [0], [0], [1], [0, 0, 1, 1], [], []>} : vector<16x16xf32>, vector<16x16xf32>, vector<16x16xf32> -> vector<16x16xf32>
    %cst_9 = arith.constant dense<0.000000e+00> : vector<16x16xf32>
    %36 = tpu.matmul %35, %32, %cst_9 {dimension_numbers = #tpu.dot_dimension_numbers<[1], [0], [0], [1], [0, 0, 1, 1], [], []>} : vector<16x16xf32>, vector<16x16xf32>, vector<16x16xf32> -> vector<16x16xf32>
    %c0_10 = arith.constant 0 : index
    %c0_11 = arith.constant 0 : index
    %c0_12 = arith.constant 0 : index
    %c0_13 = arith.constant 0 : index
    %37 = vector.load %arg3[%c0_10, %c0_11, %c0_12, %c0_13] : memref<2x4x16x16xf32, #tpu.memory_space<vmem>>, vector<1x1x16x16xf32>
    %38 = vector.shape_cast %37 : vector<1x1x16x16xf32> to vector<16x16xf32>
    %39 = vector.shape_cast %36 : vector<16x16xf32> to vector<1x1x16x16xf32>
    tpu.vector_store %arg3[%c0_10, %c0_11, %c0_12, %c0_13], %39 {strides = array<i32>} : memref<2x4x16x16xf32, #tpu.memory_space<vmem>>, vector<1x1x16x16xf32>,
    %c0_14 = arith.constant 0 : index
    %c1 = arith.constant 1 : index
    %c0_15 = arith.constant 0 : index
    %c0_16 = arith.constant 0 : index
    %40 = vector.load %arg2[%c0_14, %c1, %c0_15, %c0_16] : memref<2x4x16x16xf32, #tpu.memory_space<vmem>>, vector<1x1x16x16xf32>
    %41 = vector.shape_cast %40 : vector<1x1x16x16xf32> to vector<16x16xf32>
    %cst_17 = arith.constant dense<0.000000e+00> : vector<16x16xf32>
    %42 = tpu.matmul %23, %41, %cst_17 {dimension_numbers = #tpu.dot_dimension_numbers<[1], [0], [0], [1], [0, 0, 1, 1], [], []>} : vector<16x16xf32>, vector<16x16xf32>, vector<16x16xf32> -> vector<16x16xf32>
    %cst_18 = arith.constant dense<0.000000e+00> : vector<16x16xf32>
    %43 = tpu.matmul %42, %32, %cst_18 {dimension_numbers = #tpu.dot_dimension_numbers<[1], [0], [0], [1], [0, 0, 1, 1], [], []>} : vector<16x16xf32>, vector<16x16xf32>, vector<16x16xf32> -> vector<16x16xf32>
    %c0_19 = arith.constant 0 : index
    %c1_20 = arith.constant 1 : index
    %c0_21 = arith.constant 0 : index
    %c0_22 = arith.constant 0 : index
    %44 = vector.load %arg3[%c0_19, %c1_20, %c0_21, %c0_22] : memref<2x4x16x16xf32, #tpu.memory_space<vmem>>, vector<1x1x16x16xf32>
    %45 = vector.shape_cast %44 : vector<1x1x16x16xf32> to vector<16x16xf32>
    %46 = vector.shape_cast %43 : vector<16x16xf32> to vector<1x1x16x16xf32>
    tpu.vector_store %arg3[%c0_19, %c1_20, %c0_21, %c0_22], %46 {strides = array<i32>} : memref<2x4x16x16xf32, #tpu.memory_space<vmem>>, vector<1x1x16x16xf32>,
    %c0_23 = arith.constant 0 : index
    %c2 = arith.constant 2 : index
    %c0_24 = arith.constant 0 : index
    %c0_25 = arith.constant 0 : index
    %47 = vector.load %arg2[%c0_23, %c2, %c0_24, %c0_25] : memref<2x4x16x16xf32, #tpu.memory_space<vmem>>, vector<1x1x16x16xf32>
    %48 = vector.shape_cast %47 : vector<1x1x16x16xf32> to vector<16x16xf32>
    %cst_26 = arith.constant dense<0.000000e+00> : vector<16x16xf32>
    %49 = tpu.matmul %23, %48, %cst_26 {dimension_numbers = #tpu.dot_dimension_numbers<[1], [0], [0], [1], [0, 0, 1, 1], [], []>} : vector<16x16xf32>, vector<16x16xf32>, vector<16x16xf32> -> vector<16x16xf32>
    %cst_27 = arith.constant dense<0.000000e+00> : vector<16x16xf32>
    %50 = tpu.matmul %49, %32, %cst_27 {dimension_numbers = #tpu.dot_dimension_numbers<[1], [0], [0], [1], [0, 0, 1, 1], [], []>} : vector<16x16xf32>, vector<16x16xf32>, vector<16x16xf32> -> vector<16x16xf32>
    %c0_28 = arith.constant 0 : index
    %c2_29 = arith.constant 2 : index
    %c0_30 = arith.constant 0 : index
    %c0_31 = arith.constant 0 : index
    %51 = vector.load %arg3[%c0_28, %c2_29, %c0_30, %c0_31] : memref<2x4x16x16xf32, #tpu.memory_space<vmem>>, vector<1x1x16x16xf32>
    %52 = vector.shape_cast %51 : vector<1x1x16x16xf32> to vector<16x16xf32>
    %53 = vector.shape_cast %50 : vector<16x16xf32> to vector<1x1x16x16xf32>
    tpu.vector_store %arg3[%c0_28, %c2_29, %c0_30, %c0_31], %53 {strides = array<i32>} : memref<2x4x16x16xf32, #tpu.memory_space<vmem>>, vector<1x1x16x16xf32>,
    %c0_32 = arith.constant 0 : index
    %c3 = arith.constant 3 : index
    %c0_33 = arith.constant 0 : index
    %c0_34 = arith.constant 0 : index
    %54 = vector.load %arg2[%c0_32, %c3, %c0_33, %c0_34] : memref<2x4x16x16xf32, #tpu.memory_space<vmem>>, vector<1x1x16x16xf32>
    %55 = vector.shape_cast %54 : vector<1x1x16x16xf32> to vector<16x16xf32>
    %cst_35 = arith.constant dense<0.000000e+00> : vector<16x16xf32>
    %56 = tpu.matmul %23, %55, %cst_35 {dimension_numbers = #tpu.dot_dimension_numbers<[1], [0], [0], [1], [0, 0, 1, 1], [], []>} : vector<16x16xf32>, vector<16x16xf32>, vector<16x16xf32> -> vector<16x16xf32>
    %cst_36 = arith.constant dense<0.000000e+00> : vector<16x16xf32>
    %57 = tpu.matmul %56, %32, %cst_36 {dimension_numbers = #tpu.dot_dimension_numbers<[1], [0], [0], [1], [0, 0, 1, 1], [], []>} : vector<16x16xf32>, vector<16x16xf32>, vector<16x16xf32> -> vector<16x16xf32>
    %c0_37 = arith.constant 0 : index
    %c3_38 = arith.constant 3 : index
    %c0_39 = arith.constant 0 : index
    %c0_40 = arith.constant 0 : index
    %58 = vector.load %arg3[%c0_37, %c3_38, %c0_39, %c0_40] : memref<2x4x16x16xf32, #tpu.memory_space<vmem>>, vector<1x1x16x16xf32>
    %59 = vector.shape_cast %58 : vector<1x1x16x16xf32> to vector<16x16xf32>
    %60 = vector.shape_cast %57 : vector<16x16xf32> to vector<1x1x16x16xf32>
    tpu.vector_store %arg3[%c0_37, %c3_38, %c0_39, %c0_40], %60 {strides = array<i32>} : memref<2x4x16x16xf32, #tpu.memory_space<vmem>>, vector<1x1x16x16xf32>,
    %c2_i32_41 = arith.constant 2 : i32
    %61 = arith.muli %arg0, %c2_i32_41 : i32
    %c1_i32_42 = arith.constant 1 : i32
    %62 = arith.addi %61, %c1_i32_42 : i32
    %c2_i32_43 = arith.constant 2 : i32
    %63 = arith.muli %c2_i32_43, %62 : i32
    %64 = arith.index_cast %63 : i32 to index
    %65 = memref.load %arg1[%64] : memref<4xi32, #tpu.memory_space<smem>>
    %c4_i32_44 = arith.constant 4 : i32
    %66 = arith.subi %65, %c4_i32_44 : i32
    %c2_i32_45 = arith.constant 2 : i32
    %67 = arith.muli %c2_i32_45, %62 : i32
    %c1_i32_46 = arith.constant 1 : i32
    %68 = arith.addi %67, %c1_i32_46 : i32
    %69 = arith.index_cast %68 : i32 to index
    %70 = memref.load %arg1[%69] : memref<4xi32, #tpu.memory_space<smem>>
    %c4_i32_47 = arith.constant 4 : i32
    %71 = arith.subi %70, %c4_i32_47 : i32
    %72 = vector.broadcast %71 : i32 to vector<16x16xi32>
    %73 = arith.addi %0, %72 : vector<16x16xi32>
    %c0_i32_48 = arith.constant 0 : i32
    %c15_i32_49 = arith.constant 15 : i32
    %74 = vector.broadcast %c0_i32_48 : i32 to vector<16x16xi32>
    %75 = arith.maxsi %74, %73 : vector<16x16xi32>
    %76 = vector.broadcast %c15_i32_49 : i32 to vector<16x16xi32>
    %77 = arith.minsi %76, %75 : vector<16x16xi32>
    %78 = arith.cmpi eq, %1, %77 : vector<16x16xi32>
    %79 = arith.extui %78 : vector<16x16xi1> to vector<16x16xi32>
    %80 = arith.sitofp %79 : vector<16x16xi32> to vector<16x16xf32>
    %81 = vector.broadcast %66 : i32 to vector<16x16xi32>
    %82 = arith.addi %3, %81 : vector<16x16xi32>
    %c0_i32_50 = arith.constant 0 : i32
    %c15_i32_51 = arith.constant 15 : i32
    %83 = vector.broadcast %c0_i32_50 : i32 to vector<16x16xi32>
    %84 = arith.maxsi %83, %82 : vector<16x16xi32>
    %85 = vector.broadcast %c15_i32_51 : i32 to vector<16x16xi32>
    %86 = arith.minsi %85, %84 : vector<16x16xi32>
    %87 = arith.cmpi eq, %2, %86 : vector<16x16xi32>
    %88 = arith.extui %87 : vector<16x16xi1> to vector<16x16xi32>
    %89 = arith.sitofp %88 : vector<16x16xi32> to vector<16x16xf32>
    %c1_52 = arith.constant 1 : index
    %c0_53 = arith.constant 0 : index
    %c0_54 = arith.constant 0 : index
    %c0_55 = arith.constant 0 : index
    %90 = vector.load %arg2[%c1_52, %c0_53, %c0_54, %c0_55] : memref<2x4x16x16xf32, #tpu.memory_space<vmem>>, vector<1x1x16x16xf32>
    %91 = vector.shape_cast %90 : vector<1x1x16x16xf32> to vector<16x16xf32>
    %cst_56 = arith.constant dense<0.000000e+00> : vector<16x16xf32>
    %92 = tpu.matmul %80, %91, %cst_56 {dimension_numbers = #tpu.dot_dimension_numbers<[1], [0], [0], [1], [0, 0, 1, 1], [], []>} : vector<16x16xf32>, vector<16x16xf32>, vector<16x16xf32> -> vector<16x16xf32>
    %cst_57 = arith.constant dense<0.000000e+00> : vector<16x16xf32>
    %93 = tpu.matmul %92, %89, %cst_57 {dimension_numbers = #tpu.dot_dimension_numbers<[1], [0], [0], [1], [0, 0, 1, 1], [], []>} : vector<16x16xf32>, vector<16x16xf32>, vector<16x16xf32> -> vector<16x16xf32>
    %c1_58 = arith.constant 1 : index
    %c0_59 = arith.constant 0 : index
    %c0_60 = arith.constant 0 : index
    %c0_61 = arith.constant 0 : index
    %94 = vector.load %arg3[%c1_58, %c0_59, %c0_60, %c0_61] : memref<2x4x16x16xf32, #tpu.memory_space<vmem>>, vector<1x1x16x16xf32>
    %95 = vector.shape_cast %94 : vector<1x1x16x16xf32> to vector<16x16xf32>
    %96 = vector.shape_cast %93 : vector<16x16xf32> to vector<1x1x16x16xf32>
    tpu.vector_store %arg3[%c1_58, %c0_59, %c0_60, %c0_61], %96 {strides = array<i32>} : memref<2x4x16x16xf32, #tpu.memory_space<vmem>>, vector<1x1x16x16xf32>,
    %c1_62 = arith.constant 1 : index
    %c1_63 = arith.constant 1 : index
    %c0_64 = arith.constant 0 : index
    %c0_65 = arith.constant 0 : index
    %97 = vector.load %arg2[%c1_62, %c1_63, %c0_64, %c0_65] : memref<2x4x16x16xf32, #tpu.memory_space<vmem>>, vector<1x1x16x16xf32>
    %98 = vector.shape_cast %97 : vector<1x1x16x16xf32> to vector<16x16xf32>
    %cst_66 = arith.constant dense<0.000000e+00> : vector<16x16xf32>
    %99 = tpu.matmul %80, %98, %cst_66 {dimension_numbers = #tpu.dot_dimension_numbers<[1], [0], [0], [1], [0, 0, 1, 1], [], []>} : vector<16x16xf32>, vector<16x16xf32>, vector<16x16xf32> -> vector<16x16xf32>
    %cst_67 = arith.constant dense<0.000000e+00> : vector<16x16xf32>
    %100 = tpu.matmul %99, %89, %cst_67 {dimension_numbers = #tpu.dot_dimension_numbers<[1], [0], [0], [1], [0, 0, 1, 1], [], []>} : vector<16x16xf32>, vector<16x16xf32>, vector<16x16xf32> -> vector<16x16xf32>
    %c1_68 = arith.constant 1 : index
    %c1_69 = arith.constant 1 : index
    %c0_70 = arith.constant 0 : index
    %c0_71 = arith.constant 0 : index
    %101 = vector.load %arg3[%c1_68, %c1_69, %c0_70, %c0_71] : memref<2x4x16x16xf32, #tpu.memory_space<vmem>>, vector<1x1x16x16xf32>
    %102 = vector.shape_cast %101 : vector<1x1x16x16xf32> to vector<16x16xf32>
    %103 = vector.shape_cast %100 : vector<16x16xf32> to vector<1x1x16x16xf32>
    tpu.vector_store %arg3[%c1_68, %c1_69, %c0_70, %c0_71], %103 {strides = array<i32>} : memref<2x4x16x16xf32, #tpu.memory_space<vmem>>, vector<1x1x16x16xf32>,
    %c1_72 = arith.constant 1 : index
    %c2_73 = arith.constant 2 : index
    %c0_74 = arith.constant 0 : index
    %c0_75 = arith.constant 0 : index
    %104 = vector.load %arg2[%c1_72, %c2_73, %c0_74, %c0_75] : memref<2x4x16x16xf32, #tpu.memory_space<vmem>>, vector<1x1x16x16xf32>
    %105 = vector.shape_cast %104 : vector<1x1x16x16xf32> to vector<16x16xf32>
    %cst_76 = arith.constant dense<0.000000e+00> : vector<16x16xf32>
    %106 = tpu.matmul %80, %105, %cst_76 {dimension_numbers = #tpu.dot_dimension_numbers<[1], [0], [0], [1], [0, 0, 1, 1], [], []>} : vector<16x16xf32>, vector<16x16xf32>, vector<16x16xf32> -> vector<16x16xf32>
    %cst_77 = arith.constant dense<0.000000e+00> : vector<16x16xf32>
    %107 = tpu.matmul %106, %89, %cst_77 {dimension_numbers = #tpu.dot_dimension_numbers<[1], [0], [0], [1], [0, 0, 1, 1], [], []>} : vector<16x16xf32>, vector<16x16xf32>, vector<16x16xf32> -> vector<16x16xf32>
    %c1_78 = arith.constant 1 : index
    %c2_79 = arith.constant 2 : index
    %c0_80 = arith.constant 0 : index
    %c0_81 = arith.constant 0 : index
    %108 = vector.load %arg3[%c1_78, %c2_79, %c0_80, %c0_81] : memref<2x4x16x16xf32, #tpu.memory_space<vmem>>, vector<1x1x16x16xf32>
    %109 = vector.shape_cast %108 : vector<1x1x16x16xf32> to vector<16x16xf32>
    %110 = vector.shape_cast %107 : vector<16x16xf32> to vector<1x1x16x16xf32>
    tpu.vector_store %arg3[%c1_78, %c2_79, %c0_80, %c0_81], %110 {strides = array<i32>} : memref<2x4x16x16xf32, #tpu.memory_space<vmem>>, vector<1x1x16x16xf32>,
    %c1_82 = arith.constant 1 : index
    %c3_83 = arith.constant 3 : index
    %c0_84 = arith.constant 0 : index
    %c0_85 = arith.constant 0 : index
    %111 = vector.load %arg2[%c1_82, %c3_83, %c0_84, %c0_85] : memref<2x4x16x16xf32, #tpu.memory_space<vmem>>, vector<1x1x16x16xf32>
    %112 = vector.shape_cast %111 : vector<1x1x16x16xf32> to vector<16x16xf32>
    %cst_86 = arith.constant dense<0.000000e+00> : vector<16x16xf32>
    %113 = tpu.matmul %80, %112, %cst_86 {dimension_numbers = #tpu.dot_dimension_numbers<[1], [0], [0], [1], [0, 0, 1, 1], [], []>} : vector<16x16xf32>, vector<16x16xf32>, vector<16x16xf32> -> vector<16x16xf32>
    %cst_87 = arith.constant dense<0.000000e+00> : vector<16x16xf32>
    %114 = tpu.matmul %113, %89, %cst_87 {dimension_numbers = #tpu.dot_dimension_numbers<[1], [0], [0], [1], [0, 0, 1, 1], [], []>} : vector<16x16xf32>, vector<16x16xf32>, vector<16x16xf32> -> vector<16x16xf32>
    %c1_88 = arith.constant 1 : index
    %c3_89 = arith.constant 3 : index
    %c0_90 = arith.constant 0 : index
    %c0_91 = arith.constant 0 : index
    %115 = vector.load %arg3[%c1_88, %c3_89, %c0_90, %c0_91] : memref<2x4x16x16xf32, #tpu.memory_space<vmem>>, vector<1x1x16x16xf32>
    %116 = vector.shape_cast %115 : vector<1x1x16x16xf32> to vector<16x16xf32>
    %117 = vector.shape_cast %114 : vector<16x16xf32> to vector<1x1x16x16xf32>
    tpu.vector_store %arg3[%c1_88, %c3_89, %c0_90, %c0_91], %117 {strides = array<i32>} : memref<2x4x16x16xf32, #tpu.memory_space<vmem>>, vector<1x1x16x16xf32>,
    return
  }
  func.func @transform_0(%arg0: i32, %arg1: memref<4xi32, #tpu.memory_space<smem>>) -> (i32, i32, i32, i32) {
    %c0_i32 = arith.constant 0 : i32
    %c0_i32_0 = arith.constant 0 : i32
    %c0_i32_1 = arith.constant 0 : i32
    %c0_i32_2 = arith.constant 0 : i32
    return %arg0, %c0_i32, %c0_i32_0, %c0_i32_1 : i32, i32, i32, i32
  }
  func.func @transform_1(%arg0: i32, %arg1: memref<4xi32, #tpu.memory_space<smem>>) -> (i32, i32, i32, i32) {
    %c0_i32 = arith.constant 0 : i32
    %c0_i32_0 = arith.constant 0 : i32
    %c0_i32_1 = arith.constant 0 : i32
    %c0_i32_2 = arith.constant 0 : i32
    return %arg0, %c0_i32, %c0_i32_0, %c0_i32_1 : i32, i32, i32, i32
  }
}

</mosaic_0001>

<llo_original>
// kernel: tpu_custom_call.1
$region0: #{tpu_custom_call.1}
  #allocation0 [shape = 'u32[]', space=smem, size = 0x4, offset = 0x4, fixed_abs, tag = 'smem constant byte address 0x4 - core index']
  #allocation1 [shape = 'u32[72,128]{1,0:T(1,128)}', space=vmem, size = 0x9000, scoped, tag = 'internal scratch']
  #allocation2 [shape = 's32[1]{0}', space=sflag, size = 0x4, scoped, tag = 'scoped memory for tpu_custom_call.1']
  #allocation3 [shape = 'u8[512]{0}', space=smem, size = 0x200, scoped, tag = 'prefetched SMEM operand 0']
  %s0 = inlined_call_operand.hbm [shape: s32[4], index: 0, kind: input, shape index: {}]
  %s1 = inlined_call_operand.hbm [shape: f32[2,4,16,16], index: 1, kind: input, shape index: {}]
  %s2 = inlined_call_operand.hbm [shape: f32[2,4,16,16], index: 2, kind: output, shape index: {}]
  %s3 = sld [smem:[#allocation0]]
  $region18: #{tpu_custom_call.1} parent=0
    _
  %s5 = ssub.s32 1, %s3
  %s6 = scalar_select 0, %s5, %s3
  %s8 = sshll.u32 %s0, 4
  %s9 = int_to_ptr.hbm [resolvable:$true] %s8
  %11 = dma.hbm_to_smem %s9, 16, [#allocation3], [#allocation2]
  %13 = dma.done [#allocation2], 16
  %14 = sfence
  $region1: #{tpu_custom_call.1} parent=0
    #allocation4 [shape = 'u8[65536]{0}', space=vmem, size = 0x10000, scoped, tag = 'input window, operand 1, single buffered']
    #allocation5 [shape = 's32[1]{0}', space=sflag, size = 0x4, scoped, tag = 'scoped memory for tpu_custom_call.1']
    #allocation6 [shape = 's32[1]{0}', space=sflag, size = 0x4, scoped, tag = 'scoped memory for tpu_custom_call.1']
    #allocation7 [shape = 'u8[65536]{0}', space=vmem, size = 0x10000, scoped, tag = 'output window, operand 0, single buffered']
    %15 = vsyncpa [#allocation5], 0
    %16 = vsyncpa [#allocation6], 0
    // Predicated region
    $region2: #{tpu_custom_call.1} parent=1 // pred_check
      _
    $region3: #{tpu_custom_call.1} parent=1 // pred_check_branch
      %18 = sbr.rel (0) target = $region5
    $region4: #{tpu_custom_call.1} parent=1 // pred_region
      %20 = vsyncadd [#allocation5], 0
      %s21 = sshll.u32 %s1, 4
      %s22 = int_to_ptr.hbm [resolvable:$true] %s21
      %s23 = sshll.u32 [#allocation4], 4
      %s24 = int_to_ptr.vmem [resolvable:$true] %s23
      %29 = dma.hbm_to_vmem [thread:$0]  %s22, 2048, %s24, [#allocation5], 128, 128, 8
    $region5: #{tpu_custom_call.1} parent=1 // pred_fallthru
      _
    // Predicated region
    $region6: #{tpu_custom_call.1} parent=1 // pred_check
      _
    $region7: #{tpu_custom_call.1} parent=1 // pred_check_branch
      %31 = sbr.rel (0) target = $region9
    $region8: #{tpu_custom_call.1} parent=1 // pred_region
      %33 = dma.done [#allocation5], 2048
    $region9: #{tpu_custom_call.1} parent=1 // pred_fallthru
      _
    %v34 = vlaneseq
    %v35 = vshrl.u32 %v34, 7
    %v36 = vadd.s32 %v35, 8
    %v37 = vlaneseq
    %v38 = vand.u32 %v37, 127
    %s39 = smul.u32 0, 4
    %s40 = sld [smem:[#allocation3 + %s39]]
    %s41 = ssub.s32 %s40, 4
    %s42 = sadd.s32 %s39, 1
    %s43 = sld [smem:[#allocation3 + %s42]]
    %s44 = ssub.s32 %s43, 4
    %v45 = vstv %s44
    %v46 = vadd.s32 %v35, %v45
    %v47 = vadd.s32 %v36, %v45
    %vm48 = vcmp.gt.s32.totalorder %v46, 0
    %v49 = vsel %vm48, %v46, 0
    %vm50 = vcmp.gt.s32.totalorder %v47, 0
    %v51 = vsel %vm50, %v47, 0
    %vm52 = vcmp.lt.s32.totalorder %v49, 15
    %v53 = vsel %vm52, %v49, 15
    %vm54 = vcmp.lt.s32.totalorder %v51, 15
    %v55 = vsel %vm54, %v51, 15
    %vm56 = vcmp.eq.s32.totalorder %v38, %v53
    %vm57 = vcmp.eq.s32.totalorder %v38, %v55
    %v58 = vsel %vm56, 1, 0
    %v59 = vsel %vm57, 1, 0
    %v60 = vcvt.s32.f32 %v58
    %v61 = vcvt.s32.f32 %v59
    %v62 = vstv %s41
    %v63 = vadd.s32 %v38, %v62
    %vm64 = vcmp.gt.s32.totalorder %v63, 0
    %v65 = vsel %vm64, %v63, 0
    %vm66 = vcmp.lt.s32.totalorder %v65, 15
    %v67 = vsel %vm66, %v65, 15
    %vm68 = vcmp.eq.s32.totalorder %v35, %v67
    %vm69 = vcmp.eq.s32.totalorder %v36, %v67
    %v70 = vsel %vm68, 1, 0
    %v71 = vsel %vm69, 1, 0
    %v72 = vcvt.s32.f32 %v70
    %v73 = vcvt.s32.f32 %v71
    %v74 = vld [vmem:[#allocation4] sm:$0xff]
    %v75 = vld [vmem:[#allocation4 + $0x8] sm:$0xff]
    %vm76 = vcmask 130048
    %v78 = vsel %vm76, %v60, 0
    %v81 = vsel %vm76, %v61, 0
    %83 = vmatpush.msra.mxu0 0.0
    %84 = vmatpush.msra.mxu0 0.0
    %85 = vmatpush.msra.mxu0 0.0
    %86 = vmatpush.msra.mxu0 0.0
    %87 = vmatpush.msra.mxu0 0.0
    %88 = vmatpush.msra.mxu0 0.0
    %89 = vmatpush.msra.mxu0 0.0
    %90 = vmatpush.msra.mxu0 0.0
    %91 = vmatpush.msra.mxu0 0.0
    %92 = vmatpush.msra.mxu0 0.0
    %93 = vmatpush.msra.mxu0 0.0
    %94 = vmatpush.msra.mxu0 0.0
    %95 = vmatpush.msra.mxu0 0.0
    %96 = vmatpush.msra.mxu0 0.0
    %97 = vmatpush.msra.mxu0 %v75
    %98 = vmatpush.msra.mxu0 %v74
    %99 = vmatmul.f32.gmra.mxu0 %v78
    %v100 = vpop.f32.mrf.mxu0
    %v101 = vadd.f32 0.0, %v100
    %102 = vmatmul.f32.gmra.mxu0 %v81
    %v103 = vpop.f32.mrf.mxu0
    %v104 = vadd.f32 0.0, %v103
    %105 = vdwg.mxu0
    %v107 = vsel %vm76, %v101, 0
    %v110 = vsel %vm76, %v104, 0
    %112 = vmatpush.msra.mxu0 0.0
    %113 = vmatpush.msra.mxu0 0.0
    %114 = vmatpush.msra.mxu0 0.0
    %115 = vmatpush.msra.mxu0 0.0
    %116 = vmatpush.msra.mxu0 0.0
    %117 = vmatpush.msra.mxu0 0.0
    %118 = vmatpush.msra.mxu0 0.0
    %119 = vmatpush.msra.mxu0 0.0
    %120 = vmatpush.msra.mxu0 0.0
    %121 = vmatpush.msra.mxu0 0.0
    %122 = vmatpush.msra.mxu0 0.0
    %123 = vmatpush.msra.mxu0 0.0
    %124 = vmatpush.msra.mxu0 0.0
    %125 = vmatpush.msra.mxu0 0.0
    %126 = vmatpush.msra.mxu0 %v73
    %127 = vmatpush.msra.mxu0 %v72
    %128 = vmatmul.f32.gmra.mxu0 %v107
    %v129 = vpop.f32.mrf.mxu0
    %v130 = vadd.f32 0.0, %v129
    %131 = vmatmul.f32.gmra.mxu0 %v110
    %v132 = vpop.f32.mrf.mxu0
    %v133 = vadd.f32 0.0, %v132
    %134 = vdwg.mxu0
    %135 = vst.msk [vmem:[#allocation7] sm:$0xff] %vm76, %v130
    %136 = vst.msk [vmem:[#allocation7 + $0x8] sm:$0xff] %vm76, %v133
    %s137 = scalar_lea.vmem [#allocation4], 16
    %v138 = vld [vmem:[%s137] sm:$0xff]
    %v139 = vld [vmem:[%s137 + $0x8] sm:$0xff]
    %140 = vmatpush.msra.mxu0 0.0
    %141 = vmatpush.msra.mxu0 0.0
    %142 = vmatpush.msra.mxu0 0.0
    %143 = vmatpush.msra.mxu0 0.0
    %144 = vmatpush.msra.mxu0 0.0
    %145 = vmatpush.msra.mxu0 0.0
    %146 = vmatpush.msra.mxu0 0.0
    %147 = vmatpush.msra.mxu0 0.0
    %148 = vmatpush.msra.mxu0 0.0
    %149 = vmatpush.msra.mxu0 0.0
    %150 = vmatpush.msra.mxu0 0.0
    %151 = vmatpush.msra.mxu0 0.0
    %152 = vmatpush.msra.mxu0 0.0
    %153 = vmatpush.msra.mxu0 0.0
    %154 = vmatpush.msra.mxu0 %v139
    %155 = vmatpush.msra.mxu0 %v138
    %156 = vmatmul.f32.gmra.mxu0 %v78
    %v157 = vpop.f32.mrf.mxu0
    %v158 = vadd.f32 0.0, %v157
    %159 = vmatmul.f32.gmra.mxu0 %v81
    %v160 = vpop.f32.mrf.mxu0
    %v161 = vadd.f32 0.0, %v160
    %162 = vdwg.mxu0
    %v164 = vsel %vm76, %v158, 0
    %v167 = vsel %vm76, %v161, 0
    %169 = vmatpush.msra.mxu0 0.0
    %170 = vmatpush.msra.mxu0 0.0
    %171 = vmatpush.msra.mxu0 0.0
    %172 = vmatpush.msra.mxu0 0.0
    %173 = vmatpush.msra.mxu0 0.0
    %174 = vmatpush.msra.mxu0 0.0
    %175 = vmatpush.msra.mxu0 0.0
    %176 = vmatpush.msra.mxu0 0.0
    %177 = vmatpush.msra.mxu0 0.0
    %178 = vmatpush.msra.mxu0 0.0
    %179 = vmatpush.msra.mxu0 0.0
    %180 = vmatpush.msra.mxu0 0.0
    %181 = vmatpush.msra.mxu0 0.0
    %182 = vmatpush.msra.mxu0 0.0
    %183 = vmatpush.msra.mxu0 %v73
    %184 = vmatpush.msra.mxu0 %v72
    %185 = vmatmul.f32.gmra.mxu0 %v164
    %v186 = vpop.f32.mrf.mxu0
    %v187 = vadd.f32 0.0, %v186
    %188 = vmatmul.f32.gmra.mxu0 %v167
    %v189 = vpop.f32.mrf.mxu0
    %v190 = vadd.f32 0.0, %v189
    %191 = vdwg.mxu0
    %s192 = scalar_lea.vmem [#allocation7], 16
    %193 = vst.msk [vmem:[%s192] sm:$0xff] %vm76, %v187
    %194 = vst.msk [vmem:[%s192 + $0x8] sm:$0xff] %vm76, %v190
    %s195 = scalar_lea.vmem [#allocation4], 32
    %v196 = vld [vmem:[%s195] sm:$0xff]
    %v197 = vld [vmem:[%s195 + $0x8] sm:$0xff]
    %198 = vmatpush.msra.mxu0 0.0
    %199 = vmatpush.msra.mxu0 0.0
    %200 = vmatpush.msra.mxu0 0.0
    %201 = vmatpush.msra.mxu0 0.0
    %202 = vmatpush.msra.mxu0 0.0
    %203 = vmatpush.msra.mxu0 0.0
    %204 = vmatpush.msra.mxu0 0.0
    %205 = vmatpush.msra.mxu0 0.0
    %206 = vmatpush.msra.mxu0 0.0
    %207 = vmatpush.msra.mxu0 0.0
    %208 = vmatpush.msra.mxu0 0.0
    %209 = vmatpush.msra.mxu0 0.0
    %210 = vmatpush.msra.mxu0 0.0
    %211 = vmatpush.msra.mxu0 0.0
    %212 = vmatpush.msra.mxu0 %v197
    %213 = vmatpush.msra.mxu0 %v196
    %214 = vmatmul.f32.gmra.mxu0 %v78
    %v215 = vpop.f32.mrf.mxu0
    %v216 = vadd.f32 0.0, %v215
    %217 = vmatmul.f32.gmra.mxu0 %v81
    %v218 = vpop.f32.mrf.mxu0
    %v219 = vadd.f32 0.0, %v218
    %220 = vdwg.mxu0
    %v222 = vsel %vm76, %v216, 0
    %v225 = vsel %vm76, %v219, 0
    %227 = vmatpush.msra.mxu0 0.0
    %228 = vmatpush.msra.mxu0 0.0
    %229 = vmatpush.msra.mxu0 0.0
    %230 = vmatpush.msra.mxu0 0.0
    %231 = vmatpush.msra.mxu0 0.0
    %232 = vmatpush.msra.mxu0 0.0
    %233 = vmatpush.msra.mxu0 0.0
    %234 = vmatpush.msra.mxu0 0.0
    %235 = vmatpush.msra.mxu0 0.0
    %236 = vmatpush.msra.mxu0 0.0
    %237 = vmatpush.msra.mxu0 0.0
    %238 = vmatpush.msra.mxu0 0.0
    %239 = vmatpush.msra.mxu0 0.0
    %240 = vmatpush.msra.mxu0 0.0
    %241 = vmatpush.msra.mxu0 %v73
    %242 = vmatpush.msra.mxu0 %v72
    %243 = vmatmul.f32.gmra.mxu0 %v222
    %v244 = vpop.f32.mrf.mxu0
    %v245 = vadd.f32 0.0, %v244
    %246 = vmatmul.f32.gmra.mxu0 %v225
    %v247 = vpop.f32.mrf.mxu0
    %v248 = vadd.f32 0.0, %v247
    %249 = vdwg.mxu0
    %s250 = scalar_lea.vmem [#allocation7], 32
    %251 = vst.msk [vmem:[%s250] sm:$0xff] %vm76, %v245
    %252 = vst.msk [vmem:[%s250 + $0x8] sm:$0xff] %vm76, %v248
    %s253 = scalar_lea.vmem [#allocation4], 48
    %v254 = vld [vmem:[%s253] sm:$0xff]
    %v255 = vld [vmem:[%s253 + $0x8] sm:$0xff]
    %256 = vmatpush.msra.mxu0 0.0
    %257 = vmatpush.msra.mxu0 0.0
    %258 = vmatpush.msra.mxu0 0.0
    %259 = vmatpush.msra.mxu0 0.0
    %260 = vmatpush.msra.mxu0 0.0
    %261 = vmatpush.msra.mxu0 0.0
    %262 = vmatpush.msra.mxu0 0.0
    %263 = vmatpush.msra.mxu0 0.0
    %264 = vmatpush.msra.mxu0 0.0
    %265 = vmatpush.msra.mxu0 0.0
    %266 = vmatpush.msra.mxu0 0.0
    %267 = vmatpush.msra.mxu0 0.0
    %268 = vmatpush.msra.mxu0 0.0
    %269 = vmatpush.msra.mxu0 0.0
    %270 = vmatpush.msra.mxu0 %v255
    %271 = vmatpush.msra.mxu0 %v254
    %272 = vmatmul.f32.gmra.mxu0 %v78
    %v273 = vpop.f32.mrf.mxu0
    %v274 = vadd.f32 0.0, %v273
    %275 = vmatmul.f32.gmra.mxu0 %v81
    %v276 = vpop.f32.mrf.mxu0
    %v277 = vadd.f32 0.0, %v276
    %278 = vdwg.mxu0
    %v280 = vsel %vm76, %v274, 0
    %v283 = vsel %vm76, %v277, 0
    %285 = vmatpush.msra.mxu0 0.0
    %286 = vmatpush.msra.mxu0 0.0
    %287 = vmatpush.msra.mxu0 0.0
    %288 = vmatpush.msra.mxu0 0.0
    %289 = vmatpush.msra.mxu0 0.0
    %290 = vmatpush.msra.mxu0 0.0
    %291 = vmatpush.msra.mxu0 0.0
    %292 = vmatpush.msra.mxu0 0.0
    %293 = vmatpush.msra.mxu0 0.0
    %294 = vmatpush.msra.mxu0 0.0
    %295 = vmatpush.msra.mxu0 0.0
    %296 = vmatpush.msra.mxu0 0.0
    %297 = vmatpush.msra.mxu0 0.0
    %298 = vmatpush.msra.mxu0 0.0
    %299 = vmatpush.msra.mxu0 %v73
    %300 = vmatpush.msra.mxu0 %v72
    %301 = vmatmul.f32.gmra.mxu0 %v280
    %v302 = vpop.f32.mrf.mxu0
    %v303 = vadd.f32 0.0, %v302
    %304 = vmatmul.f32.gmra.mxu0 %v283
    %v305 = vpop.f32.mrf.mxu0
    %v306 = vadd.f32 0.0, %v305
    %307 = vdwg.mxu0
    %s308 = scalar_lea.vmem [#allocation7], 48
    %309 = vst.msk [vmem:[%s308] sm:$0xff] %vm76, %v303
    %310 = vst.msk [vmem:[%s308 + $0x8] sm:$0xff] %vm76, %v306
    %s311 = smul.u32 0, 2
    %s312 = sadd.s32 %s311, 1
    %s313 = smul.u32 %s312, 2
    %s314 = sld [smem:[#allocation3 + %s313]]
    %s315 = ssub.s32 %s314, 4
    %s316 = sadd.s32 %s313, 1
    %s317 = sld [smem:[#allocation3 + %s316]]
    %s318 = ssub.s32 %s317, 4
    %v319 = vstv %s318
    %v320 = vadd.s32 %v35, %v319
    %v321 = vadd.s32 %v36, %v319
    %vm322 = vcmp.gt.s32.totalorder %v320, 0
    %v323 = vsel %vm322, %v320, 0
    %vm324 = vcmp.gt.s32.totalorder %v321, 0
    %v325 = vsel %vm324, %v321, 0
    %vm326 = vcmp.lt.s32.totalorder %v323, 15
    %v327 = vsel %vm326, %v323, 15
    %vm328 = vcmp.lt.s32.totalorder %v325, 15
    %v329 = vsel %vm328, %v325, 15
    %vm330 = vcmp.eq.s32.totalorder %v38, %v327
    %vm331 = vcmp.eq.s32.totalorder %v38, %v329
    %v332 = vsel %vm330, 1, 0
    %v333 = vsel %vm331, 1, 0
    %v334 = vcvt.s32.f32 %v332
    %v335 = vcvt.s32.f32 %v333
    %v336 = vstv %s315
    %v337 = vadd.s32 %v38, %v336
    %vm338 = vcmp.gt.s32.totalorder %v337, 0
    %v339 = vsel %vm338, %v337, 0
    %vm340 = vcmp.lt.s32.totalorder %v339, 15
    %v341 = vsel %vm340, %v339, 15
    %vm342 = vcmp.eq.s32.totalorder %v35, %v341
    %vm343 = vcmp.eq.s32.totalorder %v36, %v341
    %v344 = vsel %vm342, 1, 0
    %v345 = vsel %vm343, 1, 0
    %v346 = vcvt.s32.f32 %v344
    %v347 = vcvt.s32.f32 %v345
    %s348 = scalar_lea.vmem [#allocation4], 64
    %v349 = vld [vmem:[%s348] sm:$0xff]
    %v350 = vld [vmem:[%s348 + $0x8] sm:$0xff]
    %v352 = vsel %vm76, %v334, 0
    %v355 = vsel %vm76, %v335, 0
    %357 = vmatpush.msra.mxu0 0.0
    %358 = vmatpush.msra.mxu0 0.0
    %359 = vmatpush.msra.mxu0 0.0
    %360 = vmatpush.msra.mxu0 0.0
    %361 = vmatpush.msra.mxu0 0.0
    %362 = vmatpush.msra.mxu0 0.0
    %363 = vmatpush.msra.mxu0 0.0
    %364 = vmatpush.msra.mxu0 0.0
    %365 = vmatpush.msra.mxu0 0.0
    %366 = vmatpush.msra.mxu0 0.0
    %367 = vmatpush.msra.mxu0 0.0
    %368 = vmatpush.msra.mxu0 0.0
    %369 = vmatpush.msra.mxu0 0.0
    %370 = vmatpush.msra.mxu0 0.0
    %371 = vmatpush.msra.mxu0 %v350
    %372 = vmatpush.msra.mxu0 %v349
    %373 = vmatmul.f32.gmra.mxu0 %v352
    %v374 = vpop.f32.mrf.mxu0
    %v375 = vadd.f32 0.0, %v374
    %376 = vmatmul.f32.gmra.mxu0 %v355
    %v377 = vpop.f32.mrf.mxu0
    %v378 = vadd.f32 0.0, %v377
    %379 = vdwg.mxu0
    %v381 = vsel %vm76, %v375, 0
    %v384 = vsel %vm76, %v378, 0
    %386 = vmatpush.msra.mxu0 0.0
    %387 = vmatpush.msra.mxu0 0.0
    %388 = vmatpush.msra.mxu0 0.0
    %389 = vmatpush.msra.mxu0 0.0
    %390 = vmatpush.msra.mxu0 0.0
    %391 = vmatpush.msra.mxu0 0.0
    %392 = vmatpush.msra.mxu0 0.0
    %393 = vmatpush.msra.mxu0 0.0
    %394 = vmatpush.msra.mxu0 0.0
    %395 = vmatpush.msra.mxu0 0.0
    %396 = vmatpush.msra.mxu0 0.0
    %397 = vmatpush.msra.mxu0 0.0
    %398 = vmatpush.msra.mxu0 0.0
    %399 = vmatpush.msra.mxu0 0.0
    %400 = vmatpush.msra.mxu0 %v347
    %401 = vmatpush.msra.mxu0 %v346
    %402 = vmatmul.f32.gmra.mxu0 %v381
    %v403 = vpop.f32.mrf.mxu0
    %v404 = vadd.f32 0.0, %v403
    %405 = vmatmul.f32.gmra.mxu0 %v384
    %v406 = vpop.f32.mrf.mxu0
    %v407 = vadd.f32 0.0, %v406
    %408 = vdwg.mxu0
    %s409 = scalar_lea.vmem [#allocation7], 64
    %410 = vst.msk [vmem:[%s409] sm:$0xff] %vm76, %v404
    %411 = vst.msk [vmem:[%s409 + $0x8] sm:$0xff] %vm76, %v407
    %s412 = scalar_lea.vmem [#allocation4], 80
    %v413 = vld [vmem:[%s412] sm:$0xff]
    %v414 = vld [vmem:[%s412 + $0x8] sm:$0xff]
    %415 = vmatpush.msra.mxu0 0.0
    %416 = vmatpush.msra.mxu0 0.0
    %417 = vmatpush.msra.mxu0 0.0
    %418 = vmatpush.msra.mxu0 0.0
    %419 = vmatpush.msra.mxu0 0.0
    %420 = vmatpush.msra.mxu0 0.0
    %421 = vmatpush.msra.mxu0 0.0
    %422 = vmatpush.msra.mxu0 0.0
    %423 = vmatpush.msra.mxu0 0.0
    %424 = vmatpush.msra.mxu0 0.0
    %425 = vmatpush.msra.mxu0 0.0
    %426 = vmatpush.msra.mxu0 0.0
    %427 = vmatpush.msra.mxu0 0.0
    %428 = vmatpush.msra.mxu0 0.0
    %429 = vmatpush.msra.mxu0 %v414
    %430 = vmatpush.msra.mxu0 %v413
    %431 = vmatmul.f32.gmra.mxu0 %v352
    %v432 = vpop.f32.mrf.mxu0
    %v433 = vadd.f32 0.0, %v432
    %434 = vmatmul.f32.gmra.mxu0 %v355
    %v435 = vpop.f32.mrf.mxu0
    %v436 = vadd.f32 0.0, %v435
    %437 = vdwg.mxu0
    %v439 = vsel %vm76, %v433, 0
    %v442 = vsel %vm76, %v436, 0
    %444 = vmatpush.msra.mxu0 0.0
    %445 = vmatpush.msra.mxu0 0.0
    %446 = vmatpush.msra.mxu0 0.0
    %447 = vmatpush.msra.mxu0 0.0
    %448 = vmatpush.msra.mxu0 0.0
    %449 = vmatpush.msra.mxu0 0.0
    %450 = vmatpush.msra.mxu0 0.0
    %451 = vmatpush.msra.mxu0 0.0
    %452 = vmatpush.msra.mxu0 0.0
    %453 = vmatpush.msra.mxu0 0.0
    %454 = vmatpush.msra.mxu0 0.0
    %455 = vmatpush.msra.mxu0 0.0
    %456 = vmatpush.msra.mxu0 0.0
    %457 = vmatpush.msra.mxu0 0.0
    %458 = vmatpush.msra.mxu0 %v347
    %459 = vmatpush.msra.mxu0 %v346
    %460 = vmatmul.f32.gmra.mxu0 %v439
    %v461 = vpop.f32.mrf.mxu0
    %v462 = vadd.f32 0.0, %v461
    %463 = vmatmul.f32.gmra.mxu0 %v442
    %v464 = vpop.f32.mrf.mxu0
    %v465 = vadd.f32 0.0, %v464
    %466 = vdwg.mxu0
    %s467 = scalar_lea.vmem [#allocation7], 80
    %468 = vst.msk [vmem:[%s467] sm:$0xff] %vm76, %v462
    %469 = vst.msk [vmem:[%s467 + $0x8] sm:$0xff] %vm76, %v465
    %s470 = scalar_lea.vmem [#allocation4], 96
    %v471 = vld [vmem:[%s470] sm:$0xff]
    %v472 = vld [vmem:[%s470 + $0x8] sm:$0xff]
    %473 = vmatpush.msra.mxu0 0.0
    %474 = vmatpush.msra.mxu0 0.0
    %475 = vmatpush.msra.mxu0 0.0
    %476 = vmatpush.msra.mxu0 0.0
    %477 = vmatpush.msra.mxu0 0.0
    %478 = vmatpush.msra.mxu0 0.0
    %479 = vmatpush.msra.mxu0 0.0
    %480 = vmatpush.msra.mxu0 0.0
    %481 = vmatpush.msra.mxu0 0.0
    %482 = vmatpush.msra.mxu0 0.0
    %483 = vmatpush.msra.mxu0 0.0
    %484 = vmatpush.msra.mxu0 0.0
    %485 = vmatpush.msra.mxu0 0.0
    %486 = vmatpush.msra.mxu0 0.0
    %487 = vmatpush.msra.mxu0 %v472
    %488 = vmatpush.msra.mxu0 %v471
    %489 = vmatmul.f32.gmra.mxu0 %v352
    %v490 = vpop.f32.mrf.mxu0
    %v491 = vadd.f32 0.0, %v490
    %492 = vmatmul.f32.gmra.mxu0 %v355
    %v493 = vpop.f32.mrf.mxu0
    %v494 = vadd.f32 0.0, %v493
    %495 = vdwg.mxu0
    %v497 = vsel %vm76, %v491, 0
    %v500 = vsel %vm76, %v494, 0
    %502 = vmatpush.msra.mxu0 0.0
    %503 = vmatpush.msra.mxu0 0.0
    %504 = vmatpush.msra.mxu0 0.0
    %505 = vmatpush.msra.mxu0 0.0
    %506 = vmatpush.msra.mxu0 0.0
    %507 = vmatpush.msra.mxu0 0.0
    %508 = vmatpush.msra.mxu0 0.0
    %509 = vmatpush.msra.mxu0 0.0
    %510 = vmatpush.msra.mxu0 0.0
    %511 = vmatpush.msra.mxu0 0.0
    %512 = vmatpush.msra.mxu0 0.0
    %513 = vmatpush.msra.mxu0 0.0
    %514 = vmatpush.msra.mxu0 0.0
    %515 = vmatpush.msra.mxu0 0.0
    %516 = vmatpush.msra.mxu0 %v347
    %517 = vmatpush.msra.mxu0 %v346
    %518 = vmatmul.f32.gmra.mxu0 %v497
    %v519 = vpop.f32.mrf.mxu0
    %v520 = vadd.f32 0.0, %v519
    %521 = vmatmul.f32.gmra.mxu0 %v500
    %v522 = vpop.f32.mrf.mxu0
    %v523 = vadd.f32 0.0, %v522
    %524 = vdwg.mxu0
    %s525 = scalar_lea.vmem [#allocation7], 96
    %526 = vst.msk [vmem:[%s525] sm:$0xff] %vm76, %v520
    %527 = vst.msk [vmem:[%s525 + $0x8] sm:$0xff] %vm76, %v523
    %s528 = scalar_lea.vmem [#allocation4], 112
    %v529 = vld [vmem:[%s528] sm:$0xff]
    %v530 = vld [vmem:[%s528 + $0x8] sm:$0xff]
    %531 = vmatpush.msra.mxu0 0.0
    %532 = vmatpush.msra.mxu0 0.0
    %533 = vmatpush.msra.mxu0 0.0
    %534 = vmatpush.msra.mxu0 0.0
    %535 = vmatpush.msra.mxu0 0.0
    %536 = vmatpush.msra.mxu0 0.0
    %537 = vmatpush.msra.mxu0 0.0
    %538 = vmatpush.msra.mxu0 0.0
    %539 = vmatpush.msra.mxu0 0.0
    %540 = vmatpush.msra.mxu0 0.0
    %541 = vmatpush.msra.mxu0 0.0
    %542 = vmatpush.msra.mxu0 0.0
    %543 = vmatpush.msra.mxu0 0.0
    %544 = vmatpush.msra.mxu0 0.0
    %545 = vmatpush.msra.mxu0 %v530
    %546 = vmatpush.msra.mxu0 %v529
    %547 = vmatmul.f32.gmra.mxu0 %v352
    %v548 = vpop.f32.mrf.mxu0
    %v549 = vadd.f32 0.0, %v548
    %550 = vmatmul.f32.gmra.mxu0 %v355
    %v551 = vpop.f32.mrf.mxu0
    %v552 = vadd.f32 0.0, %v551
    %553 = vdwg.mxu0
    %v555 = vsel %vm76, %v549, 0
    %v558 = vsel %vm76, %v552, 0
    %560 = vmatpush.msra.mxu0 0.0
    %561 = vmatpush.msra.mxu0 0.0
    %562 = vmatpush.msra.mxu0 0.0
    %563 = vmatpush.msra.mxu0 0.0
    %564 = vmatpush.msra.mxu0 0.0
    %565 = vmatpush.msra.mxu0 0.0
    %566 = vmatpush.msra.mxu0 0.0
    %567 = vmatpush.msra.mxu0 0.0
    %568 = vmatpush.msra.mxu0 0.0
    %569 = vmatpush.msra.mxu0 0.0
    %570 = vmatpush.msra.mxu0 0.0
    %571 = vmatpush.msra.mxu0 0.0
    %572 = vmatpush.msra.mxu0 0.0
    %573 = vmatpush.msra.mxu0 0.0
    %574 = vmatpush.msra.mxu0 %v347
    %575 = vmatpush.msra.mxu0 %v346
    %576 = vmatmul.f32.gmra.mxu0 %v555
    %v577 = vpop.f32.mrf.mxu0
    %v578 = vadd.f32 0.0, %v577
    %579 = vmatmul.f32.gmra.mxu0 %v558
    %v580 = vpop.f32.mrf.mxu0
    %v581 = vadd.f32 0.0, %v580
    %582 = vdwg.mxu0
    %s583 = scalar_lea.vmem [#allocation7], 112
    %584 = vst.msk [vmem:[%s583] sm:$0xff] %vm76, %v578
    %585 = vst.msk [vmem:[%s583 + $0x8] sm:$0xff] %vm76, %v581
    // Predicated region
    $region10: #{tpu_custom_call.1} parent=1 // pred_check
      _
    $region11: #{tpu_custom_call.1} parent=1 // pred_check_branch
      %587 = sbr.rel (0) target = $region13
    $region12: #{tpu_custom_call.1} parent=1 // pred_region
      %589 = vsyncadd [#allocation6], 0
      %s590 = sshll.u32 [#allocation7], 4
      %s591 = int_to_ptr.vmem [resolvable:$true] %s590
      %s592 = sshll.u32 %s2, 4
      %s593 = int_to_ptr.hbm [resolvable:$true] %s592
      %598 = dma.vmem_to_hbm [thread:$0]  %s591, 2048, %s593, [#allocation6], 128, 128, 8
    $region13: #{tpu_custom_call.1} parent=1 // pred_fallthru
      _
    // Predicated region
    $region14: #{tpu_custom_call.1} parent=1 // pred_check
      _
    $region15: #{tpu_custom_call.1} parent=1 // pred_check_branch
      %600 = sbr.rel (0) target = $region17
    $region16: #{tpu_custom_call.1} parent=1 // pred_region
      %602 = dma.done [#allocation6], 2048
    $region17: #{tpu_custom_call.1} parent=1 // pred_fallthru
      _
    %603 = vsyncpa [#allocation5], 1
    %604 = vsyncpa [#allocation6], 1

</llo_original>
